<compile_context>
chip_gen: v5e
topology: v5e:2x2
jax: 0.10.0
libtpu: 0.0.40
codegen_flags: <defaults>
</compile_context>

<pallas_src>
import functools

import numpy as np
import jax
import jax.numpy as jnp
from jax.experimental import pallas as pl
from jax.experimental.pallas import tpu as pltpu


_LANE = 128      # feature dims padded to multiples of the 128-lane vreg width
_SUBLANE = 8     # f32 sublane granularity for row tiles
_TM_MAX = 512    # max row-tile size (bigger tiles amortize per-step overhead)
_VMEM_CAP = 64 << 20   # smallest physical VMEM across v5e/v6e/v7x


def _round_up(v: int, m: int) -> int:
    return ((v + m - 1) // m) * m


def _fused_mlp_kernel(*refs, num_layers: int):
    """Whole layer chain for one [tm, C] row tile.

    refs = (x_ref, w0, b0, w1, b1, ..., w{L-1}, b{L-1}, o_ref).
    Weights/biases use a constant block index across the M grid, so they stay
    resident in VMEM; intermediate activations live only in vregs/VMEM.
    """
    x_ref = refs[0]
    o_ref = refs[-1]
    h = x_ref[...]
    for i in range(num_layers):
        w = refs[1 + 2 * i][...]
        b = refs[2 + 2 * i][...]
        y = jnp.dot(h.astype(w.dtype), w, preferred_element_type=jnp.float32)
        y = y + b.astype(jnp.float32)        # b is [1, C_out], broadcasts over rows
        if i < num_layers - 1:               # ReLU on all but the last layer
            y = jnp.maximum(y, 0.0)
        h = y                                # stays f32 between layers
    o_ref[...] = h.astype(o_ref.dtype)


def prepare_params(params, param_dtype=None):
    """Zero-pad weights/biases to lane-dense (multiple-of-128) feature dims.

    Biases are reshaped to [1, C_out] so the kernel can broadcast them.
    Zero padding preserves the exact result in the valid output columns.
    """
    padded = []
    for w, b in params:
        if param_dtype is not None:
            w = w.astype(param_dtype)
            b = b.astype(param_dtype)
        din, dout = w.shape
        din_p, dout_p = _round_up(din, _LANE), _round_up(dout, _LANE)
        wp = jnp.pad(w, ((0, din_p - din), (0, dout_p - dout)))
        bp = jnp.pad(b, (0, dout_p - dout)).reshape(1, dout_p)
        padded.append((wp, bp))
    return padded


def _pick_row_tile(M, feat_dims_padded, weight_bytes):
    """Largest row tile (multiple of 8, <= _TM_MAX) whose double-buffered
    activation tiles + resident weights leave VMEM headroom."""
    max_feat = max(feat_dims_padded)
    tm = min(_TM_MAX, _round_up(max(M, 1), _SUBLANE))
    while tm > _SUBLANE:
        # double-buffered input tile + output tile + largest intermediate (f32)
        act_bytes = 2 * tm * (feat_dims_padded[0] + feat_dims_padded[-1]) * 4
        act_bytes += tm * max_feat * 4
        if 2 * weight_bytes + act_bytes + (4 << 20) <= (_VMEM_CAP // 2):
            break
        tm -= _SUBLANE
    return max(tm, _SUBLANE)


def _fused_mlp_pallas(x2, padded_params, out_dtype, compute_dtype=None):
    """x2: [M, Cin] (unpadded) -> [M, Cout_pad] (padded rows already removed)."""
    M, cin = x2.shape
    cin_pad = padded_params[0][0].shape[0]
    cout_pad = padded_params[-1][0].shape[1]
    num_layers = len(padded_params)

    w_bytes = sum(
        w.size * np.dtype(w.dtype).itemsize + b.size * np.dtype(b.dtype).itemsize
        for w, b in padded_params
    )
    feat_dims = [cin_pad] + [w.shape[1] for w, _ in padded_params]
    tm = _pick_row_tile(M, feat_dims, w_bytes)
    m_pad = _round_up(M, tm)

    xp = x2 if compute_dtype is None else x2.astype(compute_dtype)
    if (m_pad, cin_pad) != (M, cin):
        xp = jnp.pad(xp, ((0, m_pad - M), (0, cin_pad - cin)))

    grid = (m_pad // tm,)

    in_specs = [pl.BlockSpec((tm, cin_pad), lambda i: (i, 0))]
    operands = [xp]
    for w, b in padded_params:
        din_p, dout_p = w.shape
        in_specs.append(pl.BlockSpec((din_p, dout_p), lambda i: (0, 0)))
        in_specs.append(pl.BlockSpec((1, dout_p), lambda i: (0, 0)))
        operands.extend([w, b])
    out_specs = pl.BlockSpec((tm, cout_pad), lambda i: (i, 0))

    # Advisory cost estimate + explicit VMEM budget (capped at smallest gen).
    flops = sum(2 * m_pad * w.shape[0] * w.shape[1] for w, _ in padded_params)
    bytes_accessed = (
        xp.size * np.dtype(xp.dtype).itemsize
        + w_bytes
        + m_pad * cout_pad * np.dtype(out_dtype).itemsize
    )
    act_tile_bytes = 2 * tm * (cin_pad + cout_pad) * 4 + tm * max(feat_dims) * 4
    vmem_need = 2 * w_bytes + act_tile_bytes + (4 << 20)
    vmem_limit = int(min(_VMEM_CAP, max(16 << 20, 2 * vmem_need)))

    kernel = functools.partial(_fused_mlp_kernel, num_layers=num_layers)

    y = pl.pallas_call(
        kernel,
        out_shape=jax.ShapeDtypeStruct((m_pad, cout_pad), out_dtype),
        grid_spec=pltpu.PrefetchScalarGridSpec(
            num_scalar_prefetch=0,
            grid=grid,
            in_specs=in_specs,
            out_specs=out_specs,
        ),
        compiler_params=pltpu.CompilerParams(
            dimension_semantics=("parallel",),   # row tiles shard across TCs
            vmem_limit_bytes=vmem_limit,
        ),
        cost_estimate=pl.CostEstimate(
            flops=int(flops), transcendentals=0, bytes_accessed=int(bytes_accessed)
        ),
    )(*operands)

    return y[:M]  # drop padded rows; padded feature cols dropped by caller


def mlp_forward(x, params, *, compute_dtype=None):
    """Applies the MLP: ReLU after every layer except the last (matches the
    PyTorch forward).  Accepts arbitrary leading dims; features are last.

    compute_dtype=jnp.bfloat16 casts activations/weights at the kernel
    boundary (f32 MXU accumulation is kept either way)."""
    orig_shape = x.shape
    in_dim = orig_shape[-1]
    out_dim = params[-1][0].shape[1]

    x2 = x.reshape(-1, in_dim)
    padded_params = prepare_params(params, compute_dtype)
    y2 = _fused_mlp_pallas(x2, padded_params, out_dtype=x.dtype,
                           compute_dtype=compute_dtype)
    y2 = y2[:, :out_dim]
    return y2.reshape(*orig_shape[:-1], out_dim)


def init_mlp_params(key, input_dim, hidden_dim, output_dim, num_layers,
                    dtype=jnp.float32):
    """Deterministic parameter init matching nn.Linear shapes.

    Weights stored as [in, out] (transposed vs. PyTorch's [out, in])."""
    h = [hidden_dim] * (num_layers - 1)
    dims_in = [input_dim] + h
    dims_out = h + [output_dim]
    params = []
    for n, k in zip(dims_in, dims_out):
        kw, kb, key = jax.random.split(key, 3)
        bound = 1.0 / (n ** 0.5)  # same scale as PyTorch's default Linear init
        w = jax.random.uniform(kw, (n, k), dtype=dtype, minval=-bound, maxval=bound)
        b = jax.random.uniform(kb, (k,), dtype=dtype, minval=-bound, maxval=bound)
        params.append((w, b))
    return params


def mlp_reference(x, params):
    """Plain-JAX reference for checking."""
    num_layers = len(params)
    for i, (w, b) in enumerate(params):
        x = jnp.dot(x, w) + b
        if i < num_layers - 1:
            x = jax.nn.relu(x)
    return x


if __name__ == "__main__":
    key = jax.random.PRNGKey(0)
    kx, kp, kx2 = jax.random.split(key, 3)

    # Small shapes consistent with the module: tokens [batch, seq, input_dim]
    batch, seq = 2, 8
    input_dim, hidden_dim, output_dim, num_layers = 16, 32, 4, 3

    x = jax.random.normal(kx, (batch, seq, input_dim), dtype=jnp.float32)
    params = init_mlp_params(kp, input_dim, hidden_dim, output_dim, num_layers)

    out = mlp_forward(x, params)           # f32 path matches reference to 1e-5
    out = jax.block_until_ready(out)

    ref = mlp_reference(x, params)
    assert out.shape == (batch, seq, output_dim), out.shape
    assert jnp.allclose(out, ref, atol=1e-5, rtol=1e-5), "mismatch vs reference"

    # Second check: row count not a multiple of the tile (exercises padding
    # and the multi-tile grid path).
    x_big = jax.random.normal(kx2, (600, input_dim), dtype=jnp.float32)
    out_big = jax.block_until_ready(mlp_forward(x_big, params))
    ref_big = mlp_reference(x_big, params)
    assert out_big.shape == (600, output_dim), out_big.shape
    assert jnp.allclose(out_big, ref_big, atol=1e-5, rtol=1e-5), "mismatch (big)"

    print("KERNEL_OK")
</pallas_src>

<mosaic_0001>
module attributes {stable_mosaic.version = 11 : i64} {
  func.func @_fused_mlp_kernel(%arg0: i32, %arg1: memref<16x128xf32, #tpu.memory_space<vmem>>, %arg2: memref<128x128xf32, #tpu.memory_space<vmem>>, %arg3: memref<1x128xf32, #tpu.memory_space<vmem>>, %arg4: memref<128x128xf32, #tpu.memory_space<vmem>>, %arg5: memref<1x128xf32, #tpu.memory_space<vmem>>, %arg6: memref<128x128xf32, #tpu.memory_space<vmem>>, %arg7: memref<1x128xf32, #tpu.memory_space<vmem>>, %arg8: memref<16x128xf32, #tpu.memory_space<vmem>>) attributes {dimension_semantics = [#tpu.dimension_semantics<parallel>], iteration_bounds = array<i64: 1>, scalar_prefetch = 0 : i64, scratch_operands = 0 : i64, tpu.core_type = #tpu.core_type<tc>, window_params = [{transform_indices = @transform_0, window_bounds = array<i64: 16, 128>}, {pipeline_mode = #tpu.pipeline_mode<synchronous>, transform_indices = @transform_1, window_bounds = array<i64: 128, 128>}, {pipeline_mode = #tpu.pipeline_mode<synchronous>, transform_indices = @transform_2, window_bounds = array<i64: 1, 128>}, {pipeline_mode = #tpu.pipeline_mode<synchronous>, transform_indices = @transform_3, window_bounds = array<i64: 128, 128>}, {pipeline_mode = #tpu.pipeline_mode<synchronous>, transform_indices = @transform_4, window_bounds = array<i64: 1, 128>}, {pipeline_mode = #tpu.pipeline_mode<synchronous>, transform_indices = @transform_5, window_bounds = array<i64: 128, 128>}, {pipeline_mode = #tpu.pipeline_mode<synchronous>, transform_indices = @transform_6, window_bounds = array<i64: 1, 128>}, {transform_indices = @transform_7, window_bounds = array<i64: 16, 128>}]} {
    %c0 = arith.constant 0 : index
    %c0_0 = arith.constant 0 : index
    %0 = vector.load %arg1[%c0, %c0_0] : memref<16x128xf32, #tpu.memory_space<vmem>>, vector<16x128xf32>
    %c0_1 = arith.constant 0 : index
    %c0_2 = arith.constant 0 : index
    %1 = vector.load %arg2[%c0_1, %c0_2] : memref<128x128xf32, #tpu.memory_space<vmem>>, vector<128x128xf32>
    %c0_3 = arith.constant 0 : index
    %c0_4 = arith.constant 0 : index
    %2 = vector.load %arg3[%c0_3, %c0_4] : memref<1x128xf32, #tpu.memory_space<vmem>>, vector<1x128xf32>
    %cst = arith.constant dense<0.000000e+00> : vector<16x128xf32>
    %3 = tpu.matmul %0, %1, %cst {dimension_numbers = #tpu.dot_dimension_numbers<[1], [0], [0], [1], [0, 0, 1, 1], [], []>} : vector<16x128xf32>, vector<128x128xf32>, vector<16x128xf32> -> vector<16x128xf32>
    %4 = vector.broadcast %2 : vector<1x128xf32> to vector<16x128xf32>
    %5 = arith.addf %3, %4 : vector<16x128xf32>
    %cst_5 = arith.constant 0.000000e+00 : f32
    %6 = vector.broadcast %cst_5 : f32 to vector<16x128xf32>
    %7 = arith.maximumf %5, %6 : vector<16x128xf32>
    %c0_6 = arith.constant 0 : index
    %c0_7 = arith.constant 0 : index
    %8 = vector.load %arg4[%c0_6, %c0_7] : memref<128x128xf32, #tpu.memory_space<vmem>>, vector<128x128xf32>
    %c0_8 = arith.constant 0 : index
    %c0_9 = arith.constant 0 : index
    %9 = vector.load %arg5[%c0_8, %c0_9] : memref<1x128xf32, #tpu.memory_space<vmem>>, vector<1x128xf32>
    %cst_10 = arith.constant dense<0.000000e+00> : vector<16x128xf32>
    %10 = tpu.matmul %7, %8, %cst_10 {dimension_numbers = #tpu.dot_dimension_numbers<[1], [0], [0], [1], [0, 0, 1, 1], [], []>} : vector<16x128xf32>, vector<128x128xf32>, vector<16x128xf32> -> vector<16x128xf32>
    %11 = vector.broadcast %9 : vector<1x128xf32> to vector<16x128xf32>
    %12 = arith.addf %10, %11 : vector<16x128xf32>
    %cst_11 = arith.constant 0.000000e+00 : f32
    %13 = vector.broadcast %cst_11 : f32 to vector<16x128xf32>
    %14 = arith.maximumf %12, %13 : vector<16x128xf32>
    %c0_12 = arith.constant 0 : index
    %c0_13 = arith.constant 0 : index
    %15 = vector.load %arg6[%c0_12, %c0_13] : memref<128x128xf32, #tpu.memory_space<vmem>>, vector<128x128xf32>
    %c0_14 = arith.constant 0 : index
    %c0_15 = arith.constant 0 : index
    %16 = vector.load %arg7[%c0_14, %c0_15] : memref<1x128xf32, #tpu.memory_space<vmem>>, vector<1x128xf32>
    %cst_16 = arith.constant dense<0.000000e+00> : vector<16x128xf32>
    %17 = tpu.matmul %14, %15, %cst_16 {dimension_numbers = #tpu.dot_dimension_numbers<[1], [0], [0], [1], [0, 0, 1, 1], [], []>} : vector<16x128xf32>, vector<128x128xf32>, vector<16x128xf32> -> vector<16x128xf32>
    %18 = vector.broadcast %16 : vector<1x128xf32> to vector<16x128xf32>
    %19 = arith.addf %17, %18 : vector<16x128xf32>
    %c0_17 = arith.constant 0 : index
    %c0_18 = arith.constant 0 : index
    %20 = vector.load %arg8[%c0_17, %c0_18] : memref<16x128xf32, #tpu.memory_space<vmem>>, vector<16x128xf32>
    tpu.vector_store %arg8[%c0_17, %c0_18], %19 {strides = array<i32>} : memref<16x128xf32, #tpu.memory_space<vmem>>, vector<16x128xf32>,
    return
  }
  func.func @transform_0(%arg0: i32) -> (i32, i32) {
    %c0_i32 = arith.constant 0 : i32
    %c0_i32_0 = arith.constant 0 : i32
    return %arg0, %c0_i32 : i32, i32
  }
  func.func @transform_1(%arg0: i32) -> (i32, i32) {
    %c0_i32 = arith.constant 0 : i32
    %c0_i32_0 = arith.constant 0 : i32
    %c0_i32_1 = arith.constant 0 : i32
    return %c0_i32, %c0_i32_0 : i32, i32
  }
  func.func @transform_2(%arg0: i32) -> (i32, i32) {
    %c0_i32 = arith.constant 0 : i32
    %c0_i32_0 = arith.constant 0 : i32
    %c0_i32_1 = arith.constant 0 : i32
    return %c0_i32, %c0_i32_0 : i32, i32
  }
  func.func @transform_3(%arg0: i32) -> (i32, i32) {
    %c0_i32 = arith.constant 0 : i32
    %c0_i32_0 = arith.constant 0 : i32
    %c0_i32_1 = arith.constant 0 : i32
    return %c0_i32, %c0_i32_0 : i32, i32
  }
  func.func @transform_4(%arg0: i32) -> (i32, i32) {
    %c0_i32 = arith.constant 0 : i32
    %c0_i32_0 = arith.constant 0 : i32
    %c0_i32_1 = arith.constant 0 : i32
    return %c0_i32, %c0_i32_0 : i32, i32
  }
  func.func @transform_5(%arg0: i32) -> (i32, i32) {
    %c0_i32 = arith.constant 0 : i32
    %c0_i32_0 = arith.constant 0 : i32
    %c0_i32_1 = arith.constant 0 : i32
    return %c0_i32, %c0_i32_0 : i32, i32
  }
  func.func @transform_6(%arg0: i32) -> (i32, i32) {
    %c0_i32 = arith.constant 0 : i32
    %c0_i32_0 = arith.constant 0 : i32
    %c0_i32_1 = arith.constant 0 : i32
    return %c0_i32, %c0_i32_0 : i32, i32
  }
  func.func @transform_7(%arg0: i32) -> (i32, i32) {
    %c0_i32 = arith.constant 0 : i32
    %c0_i32_0 = arith.constant 0 : i32
    return %arg0, %c0_i32 : i32, i32
  }
}

</mosaic_0001>

<llo_original>
// kernel: tpu_custom_call.1
$region0: #{tpu_custom_call.1}
  #allocation0 [shape = 'u32[]', space=smem, size = 0x4, offset = 0x4, fixed_abs, tag = 'smem constant byte address 0x4 - core index']
  #allocation1 [shape = 'u32[72,128]{1,0:T(1,128)}', space=vmem, size = 0x9000, scoped, tag = 'internal scratch']
  %s0 = inlined_call_operand.hbm [shape: f32[16,128], index: 0, kind: input, shape index: {}]
  %s1 = inlined_call_operand.hbm [shape: f32[128,128], index: 1, kind: input, shape index: {}]
  %s2 = inlined_call_operand.vmem [shape: f32[1,128], index: 2, kind: input, shape index: {}]
  %s3 = inlined_call_operand.hbm [shape: f32[128,128], index: 3, kind: input, shape index: {}]
  %s4 = inlined_call_operand.vmem [shape: f32[1,128], index: 4, kind: input, shape index: {}]
  %s5 = inlined_call_operand.hbm [shape: f32[128,128], index: 5, kind: input, shape index: {}]
  %s6 = inlined_call_operand.vmem [shape: f32[1,128], index: 6, kind: input, shape index: {}]
  %s7 = inlined_call_operand.hbm [shape: f32[16,128], index: 7, kind: output, shape index: {}]
  %s8 = sld [smem:[#allocation0]]
  $region54: #{tpu_custom_call.1} parent=0
    _
  %s10 = ssub.s32 1, %s8
  %s11 = scalar_select 0, %s10, %s8
  $region1: #{tpu_custom_call.1} parent=0
    #allocation2 [shape = 'u8[8192]{0}', space=vmem, size = 0x2000, scoped, tag = 'input window, operand 0, single buffered']
    #allocation3 [shape = 's32[1]{0}', space=sflag, size = 0x4, scoped, tag = 'scoped memory for tpu_custom_call.1']
    #allocation4 [shape = 's32[1]{0}', space=sflag, size = 0x4, scoped, tag = 'scoped memory for tpu_custom_call.1']
    #allocation5 [shape = 'u8[65536]{0}', space=vmem, size = 0x10000, scoped, tag = 'input window, operand 1, single buffered']
    #allocation6 [shape = 's32[1]{0}', space=sflag, size = 0x4, scoped, tag = 'scoped memory for tpu_custom_call.1']
    #allocation7 [shape = 'u8[65536]{0}', space=vmem, size = 0x10000, scoped, tag = 'input window, operand 3, single buffered']
    #allocation8 [shape = 'u8[65536]{0}', space=vmem, size = 0x10000, scoped, tag = 'input window, operand 5, single buffered']
    #allocation9 [shape = 's32[1]{0}', space=sflag, size = 0x4, scoped, tag = 'scoped memory for tpu_custom_call.1']
    #allocation10 [shape = 'u8[8192]{0}', space=vmem, size = 0x2000, scoped, tag = 'output window, operand 0, single buffered']
    %12 = vsyncpa [#allocation3], 0
    %13 = vsyncpa [#allocation6], 0
    %14 = vsyncpa [#allocation9], 0
    %15 = vsyncpa [#allocation4], 0
    // Predicated region
    $region2: #{tpu_custom_call.1} parent=1 // pred_check
      _
    $region3: #{tpu_custom_call.1} parent=1 // pred_check_branch
      %17 = sbr.rel (0) target = $region5
    $region4: #{tpu_custom_call.1} parent=1 // pred_region
      %19 = vsyncadd [#allocation3], 0
      %s20 = sshll.u32 %s0, 4
      %s21 = int_to_ptr.hbm [resolvable:$true] %s20
      %s22 = sshll.u32 [#allocation2], 4
      %s23 = int_to_ptr.vmem [resolvable:$true] %s22
      %28 = dma.hbm_to_vmem [thread:$0]  %s21, 256, %s23, [#allocation3], 128, 128, 8
    $region5: #{tpu_custom_call.1} parent=1 // pred_fallthru
      _
    // Predicated region
    $region6: #{tpu_custom_call.1} parent=1 // pred_check
      _
    $region7: #{tpu_custom_call.1} parent=1 // pred_check_branch
      %30 = sbr.rel (0) target = $region9
    $region8: #{tpu_custom_call.1} parent=1 // pred_region
      %32 = vsyncadd [#allocation6], 0
      %s33 = sshll.u32 %s1, 4
      %s34 = int_to_ptr.hbm [resolvable:$true] %s33
      %s35 = sshll.u32 [#allocation5], 4
      %s36 = int_to_ptr.vmem [resolvable:$true] %s35
      %41 = dma.hbm_to_vmem [thread:$0]  %s34, 2048, %s36, [#allocation6], 128, 128, 8
    $region9: #{tpu_custom_call.1} parent=1 // pred_fallthru
      _
    // Predicated region
    $region10: #{tpu_custom_call.1} parent=1 // pred_check
      _
    $region11: #{tpu_custom_call.1} parent=1 // pred_check_branch
      %43 = sbr.rel (0) target = $region13
    $region12: #{tpu_custom_call.1} parent=1 // pred_region
      _
    $region13: #{tpu_custom_call.1} parent=1 // pred_fallthru
      _
    // Predicated region
    $region14: #{tpu_custom_call.1} parent=1 // pred_check
      _
    $region15: #{tpu_custom_call.1} parent=1 // pred_check_branch
      %45 = sbr.rel (0) target = $region17
    $region16: #{tpu_custom_call.1} parent=1 // pred_region
      %47 = vsyncadd [#allocation6], 0
      %s48 = sshll.u32 %s3, 4
      %s49 = int_to_ptr.hbm [resolvable:$true] %s48
      %s50 = sshll.u32 [#allocation7], 4
      %s51 = int_to_ptr.vmem [resolvable:$true] %s50
      %56 = dma.hbm_to_vmem [thread:$0]  %s49, 2048, %s51, [#allocation6], 128, 128, 8
    $region17: #{tpu_custom_call.1} parent=1 // pred_fallthru
      _
    // Predicated region
    $region18: #{tpu_custom_call.1} parent=1 // pred_check
      _
    $region19: #{tpu_custom_call.1} parent=1 // pred_check_branch
      %58 = sbr.rel (0) target = $region21
    $region20: #{tpu_custom_call.1} parent=1 // pred_region
      _
    $region21: #{tpu_custom_call.1} parent=1 // pred_fallthru
      _
    // Predicated region
    $region22: #{tpu_custom_call.1} parent=1 // pred_check
      _
    $region23: #{tpu_custom_call.1} parent=1 // pred_check_branch
      %60 = sbr.rel (0) target = $region25
    $region24: #{tpu_custom_call.1} parent=1 // pred_region
      %62 = vsyncadd [#allocation9], 0
      %s63 = sshll.u32 %s5, 4
      %s64 = int_to_ptr.hbm [resolvable:$true] %s63
      %s65 = sshll.u32 [#allocation8], 4
      %s66 = int_to_ptr.vmem [resolvable:$true] %s65
      %71 = dma.hbm_to_vmem [thread:$0]  %s64, 2048, %s66, [#allocation9], 128, 128, 8
    $region25: #{tpu_custom_call.1} parent=1 // pred_fallthru
      _
    // Predicated region
    $region26: #{tpu_custom_call.1} parent=1 // pred_check
      _
    $region27: #{tpu_custom_call.1} parent=1 // pred_check_branch
      %73 = sbr.rel (0) target = $region29
    $region28: #{tpu_custom_call.1} parent=1 // pred_region
      _
    $region29: #{tpu_custom_call.1} parent=1 // pred_fallthru
      _
    // Predicated region
    $region30: #{tpu_custom_call.1} parent=1 // pred_check
      _
    $region31: #{tpu_custom_call.1} parent=1 // pred_check_branch
      %75 = sbr.rel (0) target = $region33
    $region32: #{tpu_custom_call.1} parent=1 // pred_region
      %77 = dma.done [#allocation3], 256
    $region33: #{tpu_custom_call.1} parent=1 // pred_fallthru
      _
    // Predicated region
    $region34: #{tpu_custom_call.1} parent=1 // pred_check
      _
    $region35: #{tpu_custom_call.1} parent=1 // pred_check_branch
      %79 = sbr.rel (0) target = $region37
    $region36: #{tpu_custom_call.1} parent=1 // pred_region
      %81 = dma.done [#allocation6], 2048
    $region37: #{tpu_custom_call.1} parent=1 // pred_fallthru
      _
    // Predicated region
    $region38: #{tpu_custom_call.1} parent=1 // pred_check
      _
    $region39: #{tpu_custom_call.1} parent=1 // pred_check_branch
      %83 = sbr.rel (0) target = $region41
    $region40: #{tpu_custom_call.1} parent=1 // pred_region
      %85 = dma.done [#allocation6], 2048
    $region41: #{tpu_custom_call.1} parent=1 // pred_fallthru
      _
    // Predicated region
    $region42: #{tpu_custom_call.1} parent=1 // pred_check
      _
    $region43: #{tpu_custom_call.1} parent=1 // pred_check_branch
      %87 = sbr.rel (0) target = $region45
    $region44: #{tpu_custom_call.1} parent=1 // pred_region
      %89 = dma.done [#allocation9], 2048
    $region45: #{tpu_custom_call.1} parent=1 // pred_fallthru
      _
    %v90 = vld [vmem:[#allocation2] sm:$0xff]
    %v91 = vld [vmem:[#allocation2 + $0x8] sm:$0xff]
    %v92 = vld [vmem:[#allocation5] sm:$0xff]
    %v93 = vld [vmem:[#allocation5 + $0x8] sm:$0xff]
    %v94 = vld [vmem:[#allocation5 + $0x10] sm:$0xff]
    %v95 = vld [vmem:[#allocation5 + $0x18] sm:$0xff]
    %v96 = vld [vmem:[#allocation5 + $0x20] sm:$0xff]
    %v97 = vld [vmem:[#allocation5 + $0x28] sm:$0xff]
    %v98 = vld [vmem:[#allocation5 + $0x30] sm:$0xff]
    %v99 = vld [vmem:[#allocation5 + $0x38] sm:$0xff]
    %v100 = vld [vmem:[#allocation5 + $0x40] sm:$0xff]
    %v101 = vld [vmem:[#allocation5 + $0x48] sm:$0xff]
    %v102 = vld [vmem:[#allocation5 + $0x50] sm:$0xff]
    %v103 = vld [vmem:[#allocation5 + $0x58] sm:$0xff]
    %v104 = vld [vmem:[#allocation5 + $0x60] sm:$0xff]
    %v105 = vld [vmem:[#allocation5 + $0x68] sm:$0xff]
    %v106 = vld [vmem:[#allocation5 + $0x70] sm:$0xff]
    %v107 = vld [vmem:[#allocation5 + $0x78] sm:$0xff]
    %v108 = vld [vmem:[%s2] sm:$0x1]
    %v110 = vperm.slane %v108, 0
    %112 = vmatpush.msra.mxu0 %v107
    %113 = vmatpush.msra.mxu0 %v106
    %114 = vmatpush.msra.mxu0 %v105
    %115 = vmatpush.msra.mxu0 %v104
    %116 = vmatpush.msra.mxu0 %v103
    %117 = vmatpush.msra.mxu0 %v102
    %118 = vmatpush.msra.mxu0 %v101
    %119 = vmatpush.msra.mxu0 %v100
    %120 = vmatpush.msra.mxu0 %v99
    %121 = vmatpush.msra.mxu0 %v98
    %122 = vmatpush.msra.mxu0 %v97
    %123 = vmatpush.msra.mxu0 %v96
    %124 = vmatpush.msra.mxu0 %v95
    %125 = vmatpush.msra.mxu0 %v94
    %126 = vmatpush.msra.mxu0 %v93
    %127 = vmatpush.msra.mxu0 %v92
    %128 = vmatmul.f32.gmra.mxu0 %v90
    %v129 = vpop.f32.mrf.mxu0
    %v130 = vadd.f32 %v110, %v129
    %131 = vmatmul.f32.gmra.mxu0 %v91
    %v132 = vpop.f32.mrf.mxu0
    %v133 = vadd.f32 %v110, %v132
    %134 = vdwg.mxu0
    %v135 = vmax.f32 %v130, 0.0
    %v136 = vmax.f32 %v133, 0.0
    %v137 = vld [vmem:[#allocation7] sm:$0xff]
    %v138 = vld [vmem:[#allocation7 + $0x8] sm:$0xff]
    %v139 = vld [vmem:[#allocation7 + $0x10] sm:$0xff]
    %v140 = vld [vmem:[#allocation7 + $0x18] sm:$0xff]
    %v141 = vld [vmem:[#allocation7 + $0x20] sm:$0xff]
    %v142 = vld [vmem:[#allocation7 + $0x28] sm:$0xff]
    %v143 = vld [vmem:[#allocation7 + $0x30] sm:$0xff]
    %v144 = vld [vmem:[#allocation7 + $0x38] sm:$0xff]
    %v145 = vld [vmem:[#allocation7 + $0x40] sm:$0xff]
    %v146 = vld [vmem:[#allocation7 + $0x48] sm:$0xff]
    %v147 = vld [vmem:[#allocation7 + $0x50] sm:$0xff]
    %v148 = vld [vmem:[#allocation7 + $0x58] sm:$0xff]
    %v149 = vld [vmem:[#allocation7 + $0x60] sm:$0xff]
    %v150 = vld [vmem:[#allocation7 + $0x68] sm:$0xff]
    %v151 = vld [vmem:[#allocation7 + $0x70] sm:$0xff]
    %v152 = vld [vmem:[#allocation7 + $0x78] sm:$0xff]
    %v153 = vld [vmem:[%s4] sm:$0x1]
    %v155 = vperm.slane %v153, 0
    %157 = vmatpush.msra.mxu0 %v152
    %158 = vmatpush.msra.mxu0 %v151
    %159 = vmatpush.msra.mxu0 %v150
    %160 = vmatpush.msra.mxu0 %v149
    %161 = vmatpush.msra.mxu0 %v148
    %162 = vmatpush.msra.mxu0 %v147
    %163 = vmatpush.msra.mxu0 %v146
    %164 = vmatpush.msra.mxu0 %v145
    %165 = vmatpush.msra.mxu0 %v144
    %166 = vmatpush.msra.mxu0 %v143
    %167 = vmatpush.msra.mxu0 %v142
    %168 = vmatpush.msra.mxu0 %v141
    %169 = vmatpush.msra.mxu0 %v140
    %170 = vmatpush.msra.mxu0 %v139
    %171 = vmatpush.msra.mxu0 %v138
    %172 = vmatpush.msra.mxu0 %v137
    %173 = vmatmul.f32.gmra.mxu0 %v135
    %v174 = vpop.f32.mrf.mxu0
    %v175 = vadd.f32 %v155, %v174
    %176 = vmatmul.f32.gmra.mxu0 %v136
    %v177 = vpop.f32.mrf.mxu0
    %v178 = vadd.f32 %v155, %v177
    %179 = vdwg.mxu0
    %v180 = vmax.f32 %v175, 0.0
    %v181 = vmax.f32 %v178, 0.0
    %v182 = vld [vmem:[#allocation8] sm:$0xff]
    %v183 = vld [vmem:[#allocation8 + $0x8] sm:$0xff]
    %v184 = vld [vmem:[#allocation8 + $0x10] sm:$0xff]
    %v185 = vld [vmem:[#allocation8 + $0x18] sm:$0xff]
    %v186 = vld [vmem:[#allocation8 + $0x20] sm:$0xff]
    %v187 = vld [vmem:[#allocation8 + $0x28] sm:$0xff]
    %v188 = vld [vmem:[#allocation8 + $0x30] sm:$0xff]
    %v189 = vld [vmem:[#allocation8 + $0x38] sm:$0xff]
    %v190 = vld [vmem:[#allocation8 + $0x40] sm:$0xff]
    %v191 = vld [vmem:[#allocation8 + $0x48] sm:$0xff]
    %v192 = vld [vmem:[#allocation8 + $0x50] sm:$0xff]
    %v193 = vld [vmem:[#allocation8 + $0x58] sm:$0xff]
    %v194 = vld [vmem:[#allocation8 + $0x60] sm:$0xff]
    %v195 = vld [vmem:[#allocation8 + $0x68] sm:$0xff]
    %v196 = vld [vmem:[#allocation8 + $0x70] sm:$0xff]
    %v197 = vld [vmem:[#allocation8 + $0x78] sm:$0xff]
    %v198 = vld [vmem:[%s6] sm:$0x1]
    %v200 = vperm.slane %v198, 0
    %202 = vmatpush.msra.mxu0 %v197
    %203 = vmatpush.msra.mxu0 %v196
    %204 = vmatpush.msra.mxu0 %v195
    %205 = vmatpush.msra.mxu0 %v194
    %206 = vmatpush.msra.mxu0 %v193
    %207 = vmatpush.msra.mxu0 %v192
    %208 = vmatpush.msra.mxu0 %v191
    %209 = vmatpush.msra.mxu0 %v190
    %210 = vmatpush.msra.mxu0 %v189
    %211 = vmatpush.msra.mxu0 %v188
    %212 = vmatpush.msra.mxu0 %v187
    %213 = vmatpush.msra.mxu0 %v186
    %214 = vmatpush.msra.mxu0 %v185
    %215 = vmatpush.msra.mxu0 %v184
    %216 = vmatpush.msra.mxu0 %v183
    %217 = vmatpush.msra.mxu0 %v182
    %218 = vmatmul.f32.gmra.mxu0 %v180
    %v219 = vpop.f32.mrf.mxu0
    %v220 = vadd.f32 %v200, %v219
    %221 = vmatmul.f32.gmra.mxu0 %v181
    %v222 = vpop.f32.mrf.mxu0
    %v223 = vadd.f32 %v200, %v222
    %224 = vdwg.mxu0
    %225 = vst [vmem:[#allocation10] sm:$0xff] %v220
    %226 = vst [vmem:[#allocation10 + $0x8] sm:$0xff] %v223
    // Predicated region
    $region46: #{tpu_custom_call.1} parent=1 // pred_check
      _
    $region47: #{tpu_custom_call.1} parent=1 // pred_check_branch
      %228 = sbr.rel (0) target = $region49
    $region48: #{tpu_custom_call.1} parent=1 // pred_region
      %230 = vsyncadd [#allocation4], 0
      %s231 = sshll.u32 [#allocation10], 4
      %s232 = int_to_ptr.vmem [resolvable:$true] %s231
      %s233 = sshll.u32 %s7, 4
      %s234 = int_to_ptr.hbm [resolvable:$true] %s233
      %239 = dma.vmem_to_hbm [thread:$0]  %s232, 256, %s234, [#allocation4], 128, 128, 8
    $region49: #{tpu_custom_call.1} parent=1 // pred_fallthru
      _
    // Predicated region
    $region50: #{tpu_custom_call.1} parent=1 // pred_check
      _
    $region51: #{tpu_custom_call.1} parent=1 // pred_check_branch
      %241 = sbr.rel (0) target = $region53
    $region52: #{tpu_custom_call.1} parent=1 // pred_region
      %243 = dma.done [#allocation4], 256
    $region53: #{tpu_custom_call.1} parent=1 // pred_fallthru
      _
    %244 = vsyncpa [#allocation3], 1
    %245 = vsyncpa [#allocation6], 1
    %246 = vsyncpa [#allocation9], 1
    %247 = vsyncpa [#allocation4], 1

</llo_original>
